<compile_context>
chip_gen: v5e
topology: v5e:2x2
jax: 0.10.0
libtpu: 0.0.40
codegen_flags: <defaults>
</compile_context>

<pallas_src>
import jax
import jax.numpy as jnp
from jax.experimental import pallas as pl
from jax.experimental.pallas import tpu as pltpu

_LANE_CAP = 32768             # max flattened last-dim (lanes); multiple of 128
_TILE_BYTES_TARGET = 4 << 20  # ~4 MiB/tile; x4 (in+out, double-buffered) = 16 MiB
_VMEM_LIMIT_BYTES = 48 << 20  # safe on all gens (v7x physical VMEM = 64 MiB)


def _copy_kernel(x_ref, o_ref):
    # Identity copy of the current VMEM tile.
    o_ref[...] = x_ref[...]


def _pick_cols(n):
    """Largest multiple of 128 that divides n (capped), for lane-dense stores."""
    best = None
    c = 128
    cap = min(n, _LANE_CAP)
    while c <= cap:
        if n % c == 0:
            best = c
        c += 128
    if best is not None:
        return best
    # n has no multiple-of-128 divisor: fall back to largest divisor <= 1024.
    for c in range(min(n, 1024), 0, -1):
        if n % c == 0:
            return c
    return 1


def _pick_tile_rows(rows, cols, itemsize):
    """Largest legal row tile that fits the per-tile VMEM budget.

    Legal = divides `rows` and is a multiple of 8, or equals `rows` (full
    extent, always legal). Returns None if no legal tile exists within the
    budget (caller pads the row axis).
    """
    max_rows = max(1, _TILE_BYTES_TARGET // (cols * itemsize))
    if rows <= max_rows:
        return rows
    cand = (max_rows // 8) * 8
    while cand >= 8:
        if rows % cand == 0:
            return cand
        cand -= 8
    return None


def _pallas_copy_2d(x2d, tile_rows):
    """Tiled identity copy of a 2D array via Pallas."""
    rows, cols = x2d.shape
    grid = (rows // tile_rows,)
    nbytes = x2d.size * jnp.dtype(x2d.dtype).itemsize
    return pl.pallas_call(
        _copy_kernel,
        out_shape=jax.ShapeDtypeStruct((rows, cols), x2d.dtype),
        grid_spec=pltpu.PrefetchScalarGridSpec(
            num_scalar_prefetch=0,
            grid=grid,
            in_specs=[pl.BlockSpec((tile_rows, cols), lambda i: (i, 0))],
            out_specs=pl.BlockSpec((tile_rows, cols), lambda i: (i, 0)),
        ),
        compiler_params=pltpu.CompilerParams(
            dimension_semantics=("parallel",),
            vmem_limit_bytes=_VMEM_LIMIT_BYTES,
        ),
        cost_estimate=pl.CostEstimate(
            flops=0, transcendentals=0, bytes_accessed=2 * nbytes),
    )(x2d)


def reshape_forward(x, target_shape):
    """Equivalent of Reshape(*target_shape).forward(x) == x.view(target_shape).

    The byte copy runs in a Pallas kernel over a lane-dense factorization of
    the flat element count; the shape reinterpretation itself is metadata-only
    and stays in JAX (row-major order matches torch .view exactly).
    """
    n = x.size
    itemsize = jnp.dtype(x.dtype).itemsize

    cols = _pick_cols(n)
    rows = n // cols
    flat = jnp.reshape(x, (rows, cols))

    tile_rows = _pick_tile_rows(rows, cols, itemsize)
    if tile_rows is None:
        # Pathological row count (no multiple-of-8 divisor fits the budget):
        # pad rows to a multiple of 8, copy, then slice the valid rows back.
        # TODO(synk): the jnp.pad adds one extra HBM pass; only hit for
        # prime-ish row counts, never for typical NN feature-map shapes.
        tile_rows = 8
        rows_padded = pl.cdiv(rows, tile_rows) * tile_rows
        flat = jnp.pad(flat, ((0, rows_padded - rows), (0, 0)))
        y2d = _pallas_copy_2d(flat, tile_rows)[:rows]
    else:
        y2d = _pallas_copy_2d(flat, tile_rows)

    return jnp.reshape(y2d, target_shape)


if __name__ == "__main__":
    key = jax.random.PRNGKey(0)
    B, C, H, W = 2, 4, 16, 16
    x = jax.random.normal(key, (B, C, H, W), dtype=jnp.float32)

    # Typical use in aet_stl10: flatten conv features per sample,
    # i.e. Reshape(-1, C*H*W) -> concrete target shape (B, C*H*W).
    target_shape = (B, C * H * W)

    y = reshape_forward(x, target_shape)
    y = jax.block_until_ready(y)

    # Verify against reference semantics (pure metadata reshape).
    ref = jnp.reshape(x, target_shape)
    assert y.shape == tuple(target_shape), (y.shape, target_shape)
    assert y.dtype == x.dtype
    assert bool(jnp.all(y == ref))

    print("KERNEL_OK")
</pallas_src>

<mosaic_0001>
module attributes {stable_mosaic.version = 11 : i64} {
  func.func @_copy_kernel(%arg0: i32, %arg1: memref<1x2048xf32, #tpu.memory_space<vmem>>, %arg2: memref<1x2048xf32, #tpu.memory_space<vmem>>) attributes {dimension_semantics = [#tpu.dimension_semantics<parallel>], iteration_bounds = array<i64: 1>, scalar_prefetch = 0 : i64, scratch_operands = 0 : i64, tpu.core_type = #tpu.core_type<tc>, window_params = [{transform_indices = @transform_0, window_bounds = array<i64: 1, 2048>}, {transform_indices = @transform_1, window_bounds = array<i64: 1, 2048>}]} {
    %c0 = arith.constant 0 : index
    %c0_0 = arith.constant 0 : index
    %0 = vector.load %arg1[%c0, %c0_0] : memref<1x2048xf32, #tpu.memory_space<vmem>>, vector<1x2048xf32>
    %c0_1 = arith.constant 0 : index
    %c0_2 = arith.constant 0 : index
    %1 = vector.load %arg2[%c0_1, %c0_2] : memref<1x2048xf32, #tpu.memory_space<vmem>>, vector<1x2048xf32>
    tpu.vector_store %arg2[%c0_1, %c0_2], %0 {strides = array<i32>} : memref<1x2048xf32, #tpu.memory_space<vmem>>, vector<1x2048xf32>,
    return
  }
  func.func @transform_0(%arg0: i32) -> (i32, i32) {
    %c0_i32 = arith.constant 0 : i32
    %c0_i32_0 = arith.constant 0 : i32
    return %arg0, %c0_i32 : i32, i32
  }
  func.func @transform_1(%arg0: i32) -> (i32, i32) {
    %c0_i32 = arith.constant 0 : i32
    %c0_i32_0 = arith.constant 0 : i32
    return %arg0, %c0_i32 : i32, i32
  }
}

</mosaic_0001>

<llo_original>
// kernel: tpu_custom_call.1
$region0: #{tpu_custom_call.1}
  #allocation0 [shape = 'u32[]', space=smem, size = 0x4, offset = 0x4, fixed_abs, tag = 'smem constant byte address 0x4 - core index']
  #allocation1 [shape = 'u32[72,128]{1,0:T(1,128)}', space=vmem, size = 0x9000, scoped, tag = 'internal scratch']
  %s0 = inlined_call_operand.hbm [shape: f32[1,2048], index: 0, kind: input, shape index: {}]
  %s1 = inlined_call_operand.hbm [shape: f32[1,2048], index: 1, kind: output, shape index: {}]
  %s2 = sld [smem:[#allocation0]]
  $region18: #{tpu_custom_call.1} parent=0
    _
  %s4 = ssub.s32 1, %s2
  %s5 = scalar_select 0, %s4, %s2
  $region1: #{tpu_custom_call.1} parent=0
    #allocation2 [shape = 'u8[8192]{0}', space=vmem, size = 0x2000, scoped, tag = 'input window, operand 0, single buffered']
    #allocation3 [shape = 's32[1]{0}', space=sflag, size = 0x4, scoped, tag = 'scoped memory for tpu_custom_call.1']
    #allocation4 [shape = 's32[1]{0}', space=sflag, size = 0x4, scoped, tag = 'scoped memory for tpu_custom_call.1']
    #allocation5 [shape = 'u8[8192]{0}', space=vmem, size = 0x2000, scoped, tag = 'output window, operand 0, single buffered']
    %6 = vsyncpa [#allocation3], 0
    %7 = vsyncpa [#allocation4], 0
    // Predicated region
    $region2: #{tpu_custom_call.1} parent=1 // pred_check
      _
    $region3: #{tpu_custom_call.1} parent=1 // pred_check_branch
      %9 = sbr.rel (0) target = $region5
    $region4: #{tpu_custom_call.1} parent=1 // pred_region
      %11 = vsyncadd [#allocation3], 0
      %s13 = sshll.u32 %s0, 4
      %s14 = int_to_ptr.hbm [resolvable:$true] %s13
      %s15 = sshll.u32 [#allocation2], 4
      %s16 = int_to_ptr.vmem [resolvable:$true] %s15
      %18 = dma.hbm_to_vmem [thread:$0]  %s14, 256, %s16, [#allocation3]
    $region5: #{tpu_custom_call.1} parent=1 // pred_fallthru
      _
    // Predicated region
    $region6: #{tpu_custom_call.1} parent=1 // pred_check
      _
    $region7: #{tpu_custom_call.1} parent=1 // pred_check_branch
      %20 = sbr.rel (0) target = $region9
    $region8: #{tpu_custom_call.1} parent=1 // pred_region
      %22 = dma.done [#allocation3], 256
    $region9: #{tpu_custom_call.1} parent=1 // pred_fallthru
      _
    %v23 = vld [vmem:[#allocation2] sm:$0xff]
    %v24 = vld [vmem:[#allocation2 + $0x8] sm:$0xff]
    %25 = vst [vmem:[#allocation5] sm:$0xff] %v23
    %26 = vst [vmem:[#allocation5 + $0x8] sm:$0xff] %v24
    // Predicated region
    $region10: #{tpu_custom_call.1} parent=1 // pred_check
      _
    $region11: #{tpu_custom_call.1} parent=1 // pred_check_branch
      %28 = sbr.rel (0) target = $region13
    $region12: #{tpu_custom_call.1} parent=1 // pred_region
      %30 = vsyncadd [#allocation4], 0
      %s32 = sshll.u32 [#allocation5], 4
      %s33 = int_to_ptr.vmem [resolvable:$true] %s32
      %s34 = sshll.u32 %s1, 4
      %s35 = int_to_ptr.hbm [resolvable:$true] %s34
      %37 = dma.vmem_to_hbm [thread:$0]  %s33, 256, %s35, [#allocation4]
    $region13: #{tpu_custom_call.1} parent=1 // pred_fallthru
      _
    // Predicated region
    $region14: #{tpu_custom_call.1} parent=1 // pred_check
      _
    $region15: #{tpu_custom_call.1} parent=1 // pred_check_branch
      %39 = sbr.rel (0) target = $region17
    $region16: #{tpu_custom_call.1} parent=1 // pred_region
      %41 = dma.done [#allocation4], 256
    $region17: #{tpu_custom_call.1} parent=1 // pred_fallthru
      _
    %42 = vsyncpa [#allocation3], 1
    %43 = vsyncpa [#allocation4], 1

</llo_original>
